<compile_context>
chip_gen: v6e
topology: v6e:2x2x1
jax: 0.10.0
libtpu: 0.0.40
codegen_flags: <defaults>
</compile_context>

<pallas_src>
import jax
import jax.numpy as jnp
from jax import lax
from jax.experimental import pallas as pl
from jax.experimental.pallas import tpu as pltpu


# --------------------------------------------------------------------------- #
# helpers
# --------------------------------------------------------------------------- #
def _round_up(x, m):
    return (x + m - 1) // m * m


def _floor_to(x, m):
    return (x // m) * m


def _cdiv(a, b):
    return (a + b - 1) // b


def _vmem_capacity_bytes():
    """Physical VMEM of the attached TPU; conservative (v7x, 64 MiB) fallback."""
    try:
        info = pltpu.get_tpu_info()
        cap = int(getattr(info, "vmem_capacity_bytes", 0) or 0)
        if cap > 0:
            return cap
    except Exception:
        pass
    return 64 * 1024 * 1024


def _block_spec(shape, index_map, *, buffer_count=None):
    """BlockSpec, optionally with an explicit buffer count (graceful fallback)."""
    if buffer_count is not None and hasattr(pl, "Buffered"):
        try:
            return pl.BlockSpec(shape, index_map,
                                pipeline_mode=pl.Buffered(buffer_count))
        except TypeError:
            pass
    return pl.BlockSpec(shape, index_map)


# --------------------------------------------------------------------------- #
# kernels (BN already folded into weight/bias -> pure matmul + bias)
# --------------------------------------------------------------------------- #
def _linear_bias_kernel(x_ref, w_ref, b_ref, o_ref):
    acc = jnp.dot(x_ref[...], w_ref[...], preferred_element_type=jnp.float32)
    o_ref[...] = (acc + b_ref[...]).astype(o_ref.dtype)


def _linear_bias_ktiled_kernel(x_ref, w_ref, b_ref, o_ref, acc_ref):
    @pl.when(pl.program_id(2) == 0)
    def _init():
        acc_ref[...] = jnp.zeros_like(acc_ref)

    acc_ref[...] += jnp.dot(x_ref[...], w_ref[...],
                            preferred_element_type=jnp.float32)

    @pl.when(pl.program_id(2) == pl.num_programs(2) - 1)
    def _finalize():
        o_ref[...] = (acc_ref[...] + b_ref[...]).astype(o_ref.dtype)


# --------------------------------------------------------------------------- #
# BN fold (the module's init_fusion math) -- cacheable, call once per weights
# --------------------------------------------------------------------------- #
def fold_bn_into_linear(gamma, beta, running_mean, running_var, weight, bias,
                        *, eps=1e-5, prefused_bn_fc=False):
    """Fold inference-mode BatchNorm1d into the Linear.

    weight: (O, F) PyTorch Linear layout, bias: (O,).
    Returns (w_t, b): folded weight transposed to (F, O) in f32 and folded bias
    (O,) in f32.  For repeated inference, fold once and call fused_linear().
    Note: folding the BN scale into the weight before a bf16 cast loses a touch
    more precision than normalizing in f32; accuracy-sensitive users should run
    with compute_dtype=jnp.float32.
    """
    w32 = weight.astype(jnp.float32)
    b32 = bias.astype(jnp.float32)
    if not prefused_bn_fc:
        scale = gamma.astype(jnp.float32) * lax.rsqrt(
            running_var.astype(jnp.float32) + eps)                       # (F,)
        shift = beta.astype(jnp.float32) - running_mean.astype(jnp.float32) * scale
        b32 = b32 + w32 @ shift
        w32 = w32 * scale[None, :]
    return w32.T, b32                                                    # (F,O), (O,)


# --------------------------------------------------------------------------- #
# tile selection
# --------------------------------------------------------------------------- #
def _choose_tiles(N, F, O_pad, in_it, out_it, sublane, budget,
                  tile_m_hint, tile_n_hint, tile_k_hint, w_bufs):
    def fp(tm, tn, tk, ksplit):
        f = 2 * tm * tk * in_it            # x tiles (double-buffered)
        f += w_bufs * tk * tn * in_it      # folded weight
        f += w_bufs * tn * 4               # folded bias (f32)
        f += 2 * tm * tn * out_it          # output tiles (double-buffered)
        if ksplit:
            f += tm * tn * 4               # f32 accumulator scratch
        return f

    tm = max(sublane, min(_round_up(tile_m_hint, sublane), _round_up(N, sublane)))
    if tile_k_hint is not None:
        tk = max(128, _floor_to(min(int(tile_k_hint), _round_up(F, 128)), 128))
        ksplit = tk < F
        if not ksplit:
            tk = F
    else:
        tk, ksplit = F, False

    # Prefer a fully VMEM-resident folded weight (one HBM fetch per call).
    tm_floor = max(sublane, min(128, _round_up(N, sublane)))
    if (not ksplit) and fp(tm_floor, O_pad, tk, False) <= budget:
        tn = O_pad
    else:
        tn = max(128, min(_round_up(tile_n_hint, 128), O_pad))

    # Shrink until the pipelined footprint fits the budget.  tile_m floors at
    # 128 before tile_n shrinks; K-tiling is the large-F fallback.
    while fp(tm, tn, tk, ksplit) > budget:
        if tm > 128:
            tm = max(128, _floor_to(tm // 2, sublane))
        elif tn > 128:
            tn = max(128, _floor_to(tn // 2, 128))
        elif tk > 128:
            ksplit = True
            tk = max(128, _floor_to(tk // 2, 128))
        elif tm > sublane:
            tm = max(sublane, _floor_to(tm // 2, sublane))
        else:
            break
    return tm, tn, tk, ksplit, fp(tm, tn, tk, ksplit)


# --------------------------------------------------------------------------- #
# pallas wrapper: y = x @ w_t + b
# --------------------------------------------------------------------------- #
def fused_linear(x, w_t, b, *, compute_dtype=jnp.bfloat16, out_dtype=None,
                 tile_m=None, tile_n=None, tile_k=None, vmem_budget_bytes=None):
    """x: (..., F); w_t: (F, O) folded weight; b: (O,). Returns (..., O)."""
    orig_shape = x.shape
    F = orig_shape[-1]
    x2 = x.reshape(-1, F)
    N = x2.shape[0]
    Fw, O = w_t.shape
    assert Fw == F, f"weight/input feature mismatch: {Fw} vs {F}"

    out_dtype = jnp.dtype(out_dtype) if out_dtype is not None else x.dtype
    compute_dtype = jnp.dtype(compute_dtype)
    in_it = compute_dtype.itemsize
    out_it = jnp.dtype(out_dtype).itemsize
    sublane = {1: 32, 2: 16, 4: 8}.get(in_it, 8)

    O_pad = _round_up(O, 128)              # lane-dense (unmasked) output stores

    cap = _vmem_capacity_bytes()
    budget = (int(vmem_budget_bytes) if vmem_budget_bytes is not None
              else int(0.65 * cap))        # ~83 MiB v5e/v6e, ~41 MiB v7x
    if tile_m is None:
        tile_m = 512 if budget >= (64 << 20) else 256
    if tile_n is None:
        tile_n = 1024 if budget >= (64 << 20) else 512

    have_buffered = hasattr(pl, "Buffered")

    # Select tiles assuming a double-buffered weight; only if single-buffering
    # (pl.Buffered(1)) is what it takes to keep the folded weight grid-resident
    # do we retry with it (matters mainly under v7x's 64 MiB VMEM).
    args = (N, F, O_pad, in_it, out_it, sublane, budget, tile_m, tile_n, tile_k)
    tm, tn, tk, ksplit, footprint = _choose_tiles(*args, w_bufs=2)
    use_single_buf_w = False
    if have_buffered and (not ksplit) and tn < O_pad:
        tm1, tn1, tk1, ks1, fp1 = _choose_tiles(*args, w_bufs=1)
        if (not ks1) and tn1 == O_pad:
            tm, tn, tk, ksplit, footprint = tm1, tn1, tk1, ks1, fp1
            use_single_buf_w = True

    gm = _cdiv(N, tm)
    gn = _cdiv(O_pad, tn)
    gk = _cdiv(F, tk) if ksplit else 1

    # v7x has 2 TensorCores: a big single-tile batch should still give >= 2
    # "parallel" grid steps to shard across.
    if gm * gn == 1 and N >= 256:
        tm = max(sublane, _round_up(_cdiv(N, 2), sublane))
        gm = _cdiv(N, tm)

    # --------- operand preparation (cast + lane-dense column pad only) -------
    x_c = x2.astype(compute_dtype)          # no pad along N: ragged cdiv grid
    w_c = w_t.astype(compute_dtype)
    b_c = b.reshape(1, O).astype(jnp.float32)
    if O_pad != O:
        w_c = jnp.pad(w_c, ((0, 0), (0, O_pad - O)))
        b_c = jnp.pad(b_c, ((0, 0), (0, O_pad - O)))
    F_pad = F
    if ksplit:
        F_pad = gk * tk
        if F_pad != F:
            # TODO(synk): only the large-F K-tiling fallback pays this extra HBM
            # pass over x (zero-padding the reduction axis keeps results exact).
            x_c = jnp.pad(x_c, ((0, 0), (0, F_pad - F)))
            w_c = jnp.pad(w_c, ((0, F_pad - F), (0, 0)))

    # ------------------------------- specs ----------------------------------
    if not ksplit:
        # Pick the (i, j) ordering that minimizes redundant HBM streaming: the
        # operand whose block index is constant along the inner grid axis is
        # fetched once per outer step (Pallas skips the re-DMA otherwise).
        traffic_i_outer = N * F + gm * F * O_pad        # x once, W gm times
        traffic_j_outer = gn * N * F + F * O_pad        # W once, x gn times
        wb = 1 if use_single_buf_w else None
        if traffic_j_outer <= traffic_i_outer:
            grid = (gn, gm)
            in_specs = [
                pl.BlockSpec((tm, tk), lambda j, i: (i, 0)),
                _block_spec((tk, tn), lambda j, i: (0, j), buffer_count=wb),
                _block_spec((1, tn), lambda j, i: (0, j), buffer_count=wb),
            ]
            out_spec = pl.BlockSpec((tm, tn), lambda j, i: (i, j))
        else:
            grid = (gm, gn)
            in_specs = [
                pl.BlockSpec((tm, tk), lambda i, j: (i, 0)),
                _block_spec((tk, tn), lambda i, j: (0, j), buffer_count=wb),
                _block_spec((1, tn), lambda i, j: (0, j), buffer_count=wb),
            ]
            out_spec = pl.BlockSpec((tm, tn), lambda i, j: (i, j))
        kernel = _linear_bias_kernel
        scratch_shapes = []
        dim_sem = ("parallel", "parallel")
    else:
        grid = (gm, gn, gk)                 # reduction axis last, "arbitrary"
        in_specs = [
            pl.BlockSpec((tm, tk), lambda i, j, k: (i, k)),
            pl.BlockSpec((tk, tn), lambda i, j, k: (k, j)),
            pl.BlockSpec((1, tn), lambda i, j, k: (0, j)),
        ]
        out_spec = pl.BlockSpec((tm, tn), lambda i, j, k: (i, j))
        kernel = _linear_bias_ktiled_kernel
        scratch_shapes = [pltpu.VMEM((tm, tn), jnp.float32)]
        dim_sem = ("parallel", "parallel", "arbitrary")

    vmem_limit = int(min(max(32 * 1024 * 1024, footprint + (8 << 20)),
                         int(0.92 * cap)))

    call_kwargs = dict(
        out_shape=jax.ShapeDtypeStruct((N, O_pad), out_dtype),
        grid_spec=pltpu.PrefetchScalarGridSpec(
            num_scalar_prefetch=0,
            grid=grid,
            in_specs=in_specs,
            out_specs=out_spec,
            scratch_shapes=scratch_shapes,
        ),
        compiler_params=pltpu.CompilerParams(
            dimension_semantics=dim_sem,
            vmem_limit_bytes=vmem_limit,
        ),
    )
    try:    # advisory scheduling hint only
        call_kwargs["cost_estimate"] = pl.CostEstimate(
            flops=int(2 * N * F_pad * O_pad),
            transcendentals=0,
            bytes_accessed=int(N * F_pad * in_it + F_pad * O_pad * in_it
                               + O_pad * 4 + N * O_pad * out_it),
        )
    except Exception:
        pass

    out = pl.pallas_call(kernel, **call_kwargs)(x_c, w_c, b_c)

    if O_pad != O:
        out = out[:, :O]
    return out.reshape(*orig_shape[:-1], O)


# --------------------------------------------------------------------------- #
# module forward
# --------------------------------------------------------------------------- #
def fused_batchnorm1d_linear(x, gamma, beta, running_mean, running_var,
                             weight, bias, *, eps=1e-5, prefused_bn_fc=False,
                             compute_dtype=jnp.bfloat16, out_dtype=None,
                             tile_m=None, tile_n=None, tile_k=None,
                             vmem_budget_bytes=None):
    """Forward of FusedBatchNorm1dLinear (inference-mode BatchNorm1d).

    x: (..., F); weight: (O, F) (PyTorch Linear layout); bias: (O,).
    """
    # TODO(synk): training-mode BatchNorm1d (batch statistics + running-stat
    # updates) has no clean single-kernel equivalent here; this implements the
    # eval/inference forward only.
    w_t, b = fold_bn_into_linear(gamma, beta, running_mean, running_var,
                                 weight, bias, eps=eps,
                                 prefused_bn_fc=prefused_bn_fc)
    return fused_linear(x, w_t, b, compute_dtype=compute_dtype,
                        out_dtype=out_dtype, tile_m=tile_m, tile_n=tile_n,
                        tile_k=tile_k, vmem_budget_bytes=vmem_budget_bytes)


# --------------------------------------------------------------------------- #
# self-test
# --------------------------------------------------------------------------- #
if __name__ == "__main__":
    eps = 1e-5
    key = jax.random.PRNGKey(0)

    def make_inputs(k, N, F, O):
        kx, kg, kb, km, kv, kw, kbias = jax.random.split(k, 7)
        x = jax.random.normal(kx, (N, F), dtype=jnp.float32)
        gamma = jax.random.normal(kg, (F,), dtype=jnp.float32) * 0.1 + 1.0
        beta = jax.random.normal(kb, (F,), dtype=jnp.float32) * 0.1
        running_mean = jax.random.normal(km, (F,), dtype=jnp.float32) * 0.5
        running_var = jax.random.uniform(kv, (F,), dtype=jnp.float32,
                                         minval=0.5, maxval=1.5)
        weight = jax.random.normal(kw, (O, F), dtype=jnp.float32) / jnp.sqrt(F)
        bias = jax.random.normal(kbias, (O,), dtype=jnp.float32) * 0.1
        return x, gamma, beta, running_mean, running_var, weight, bias

    def reference(x, gamma, beta, running_mean, running_var, weight, bias):
        xn = (x - running_mean) * (gamma * lax.rsqrt(running_var + eps)) + beta
        return xn @ weight.T + bias

    k1, k2, k3 = jax.random.split(key, 3)

    # Case 1: f32 compute, resident-weight path (O=24 padded to 128 lanes).
    args1 = make_inputs(k1, 16, 32, 24)
    run1 = jax.jit(lambda *a: fused_batchnorm1d_linear(
        *a, eps=eps, compute_dtype=jnp.float32))
    out1 = jax.block_until_ready(run1(*args1))
    ref1 = reference(*args1)
    assert out1.shape == ref1.shape == (16, 24)
    # tolerance covers possible bf16-pass MXU precision in either implementation
    assert jnp.allclose(out1, ref1, atol=2e-2, rtol=2e-2), "f32 mismatch (case 1)"

    # Case 2: default bf16 MXU inputs, ragged N=40, O=200 -> lane-dense 256.
    args2 = make_inputs(k2, 40, 32, 200)
    run2 = jax.jit(lambda *a: fused_batchnorm1d_linear(*a, eps=eps))
    out2 = jax.block_until_ready(run2(*args2))
    ref2 = reference(*args2)
    assert out2.shape == ref2.shape == (40, 200)
    assert jnp.allclose(out2, ref2, atol=5e-2, rtol=5e-2), "bf16 mismatch (case 2)"

    # Case 3: prefused path (BN already folded by init_fusion -> plain linear).
    run3 = jax.jit(lambda *a: fused_batchnorm1d_linear(
        *a, eps=eps, prefused_bn_fc=True, compute_dtype=jnp.float32))
    out3 = jax.block_until_ready(run3(*args1))
    x1, _, _, _, _, w1, b1 = args1
    ref3 = x1 @ w1.T + b1
    assert jnp.allclose(out3, ref3, atol=2e-2, rtol=2e-2), "prefused mismatch (case 3)"

    # Case 4: forced K-tiling (3-D grid, reduction axis last, f32 accumulator).
    args4 = make_inputs(k3, 24, 200, 136)
    run4 = jax.jit(lambda *a: fused_batchnorm1d_linear(
        *a, eps=eps, compute_dtype=jnp.float32, tile_k=128))
    out4 = jax.block_until_ready(run4(*args4))
    ref4 = reference(*args4)
    assert out4.shape == ref4.shape == (24, 136)
    assert jnp.allclose(out4, ref4, atol=2e-2, rtol=2e-2), "k-tiled mismatch (case 4)"

    print("KERNEL_OK")
</pallas_src>

<mosaic_0001>
module attributes {stable_mosaic.version = 11 : i64} {
  func.func @_linear_bias_kernel(%arg0: i32, %arg1: i32, %arg2: memref<16x32xf32, #tpu.memory_space<vmem>>, %arg3: memref<32x128xf32, #tpu.memory_space<vmem>>, %arg4: memref<1x128xf32, #tpu.memory_space<vmem>>, %arg5: memref<16x128xf32, #tpu.memory_space<vmem>>) attributes {dimension_semantics = [#tpu.dimension_semantics<parallel>, #tpu.dimension_semantics<parallel>], iteration_bounds = array<i64: 1, 1>, scalar_prefetch = 0 : i64, scratch_operands = 0 : i64, tpu.core_type = #tpu.core_type<tc>, window_params = [{transform_indices = @transform_0, window_bounds = array<i64: 16, 32>}, {transform_indices = @transform_1, window_bounds = array<i64: 32, 128>}, {transform_indices = @transform_2, window_bounds = array<i64: 1, 128>}, {transform_indices = @transform_3, window_bounds = array<i64: 16, 128>}]} {
    %c0 = arith.constant 0 : index
    %c0_0 = arith.constant 0 : index
    %0 = vector.load %arg2[%c0, %c0_0] : memref<16x32xf32, #tpu.memory_space<vmem>>, vector<16x32xf32>
    %c0_1 = arith.constant 0 : index
    %c0_2 = arith.constant 0 : index
    %1 = vector.load %arg3[%c0_1, %c0_2] : memref<32x128xf32, #tpu.memory_space<vmem>>, vector<32x128xf32>
    %cst = arith.constant dense<0.000000e+00> : vector<16x128xf32>
    %2 = tpu.matmul %0, %1, %cst {dimension_numbers = #tpu.dot_dimension_numbers<[1], [0], [0], [1], [0, 0, 1, 1], [], []>} : vector<16x32xf32>, vector<32x128xf32>, vector<16x128xf32> -> vector<16x128xf32>
    %c0_3 = arith.constant 0 : index
    %c0_4 = arith.constant 0 : index
    %3 = vector.load %arg4[%c0_3, %c0_4] : memref<1x128xf32, #tpu.memory_space<vmem>>, vector<1x128xf32>
    %4 = vector.broadcast %3 : vector<1x128xf32> to vector<16x128xf32>
    %5 = arith.addf %2, %4 : vector<16x128xf32>
    %c0_5 = arith.constant 0 : index
    %c0_6 = arith.constant 0 : index
    %6 = vector.load %arg5[%c0_5, %c0_6] : memref<16x128xf32, #tpu.memory_space<vmem>>, vector<16x128xf32>
    tpu.vector_store %arg5[%c0_5, %c0_6], %5 {strides = array<i32>} : memref<16x128xf32, #tpu.memory_space<vmem>>, vector<16x128xf32>,
    return
  }
  func.func @transform_0(%arg0: i32, %arg1: i32) -> (i32, i32) {
    %c0_i32 = arith.constant 0 : i32
    %c0_i32_0 = arith.constant 0 : i32
    return %arg1, %c0_i32 : i32, i32
  }
  func.func @transform_1(%arg0: i32, %arg1: i32) -> (i32, i32) {
    %c0_i32 = arith.constant 0 : i32
    %c0_i32_0 = arith.constant 0 : i32
    return %c0_i32, %arg0 : i32, i32
  }
  func.func @transform_2(%arg0: i32, %arg1: i32) -> (i32, i32) {
    %c0_i32 = arith.constant 0 : i32
    %c0_i32_0 = arith.constant 0 : i32
    return %c0_i32, %arg0 : i32, i32
  }
  func.func @transform_3(%arg0: i32, %arg1: i32) -> (i32, i32) {
    %c0_i32 = arith.constant 0 : i32
    return %arg1, %arg0 : i32, i32
  }
}

</mosaic_0001>

<llo_original>
// kernel: _lambda_.1
$region0: #{_lambda_.1}
  #allocation0 [shape = 'u32[]', space=smem, size = 0x4, offset = 0x4, fixed_abs, tag = 'smem constant byte address 0x4 - core index']
  #allocation1 [shape = 'u32[144,128]{1,0:T(1,128)}', space=vmem, size = 0x12000, scoped, tag = 'internal scratch']
  %s0 = inlined_call_operand.vmem [shape: f32[16,32], index: 0, kind: input, shape index: {}]
  %s1 = inlined_call_operand.vmem [shape: f32[32,128], index: 1, kind: input, shape index: {}]
  %s2 = inlined_call_operand.vmem [shape: f32[1,128], index: 2, kind: input, shape index: {}]
  %s3 = inlined_call_operand.hbm [shape: f32[16,128], index: 3, kind: output, shape index: {}]
  %s4 = sld [smem:[#allocation0]]
  $region22: #{_lambda_.1} parent=0
    _
  %s6 = ssub.s32 1, %s4
  %s7 = scalar_select 0, %s6, %s4
  $region1: #{_lambda_.1} parent=0
    #allocation2 [shape = 'u8[8192]{0}', space=vmem, size = 0x2000, scoped, tag = 'output window, operand 0, single buffered']
    #allocation3 [shape = 's32[1]{0}', space=sflag, size = 0x4, scoped, tag = 'scoped memory for _lambda_.1']
    %8 = vsyncpa [#allocation3], 0
    // Predicated region
    $region2: #{_lambda_.1} parent=1 // pred_check
      _
    $region3: #{_lambda_.1} parent=1 // pred_check_branch
      %10 = sbr.rel (0) target = $region5
    $region4: #{_lambda_.1} parent=1 // pred_region
      _
    $region5: #{_lambda_.1} parent=1 // pred_fallthru
      _
    // Predicated region
    $region6: #{_lambda_.1} parent=1 // pred_check
      _
    $region7: #{_lambda_.1} parent=1 // pred_check_branch
      %12 = sbr.rel (0) target = $region9
    $region8: #{_lambda_.1} parent=1 // pred_region
      _
    $region9: #{_lambda_.1} parent=1 // pred_fallthru
      _
    // Predicated region
    $region10: #{_lambda_.1} parent=1 // pred_check
      _
    $region11: #{_lambda_.1} parent=1 // pred_check_branch
      %14 = sbr.rel (0) target = $region13
    $region12: #{_lambda_.1} parent=1 // pred_region
      _
    $region13: #{_lambda_.1} parent=1 // pred_fallthru
      _
    %v15 = vld [vmem:[%s0] sm:$0xff]
    %v16 = vld [vmem:[%s0 + $0x8] sm:$0xff]
    %v17 = vld [vmem:[%s1] sm:$0xff]
    %v18 = vld [vmem:[%s1 + $0x8] sm:$0xff]
    %v19 = vld [vmem:[%s1 + $0x10] sm:$0xff]
    %v20 = vld [vmem:[%s1 + $0x18] sm:$0xff]
    %v21 = vld [vmem:[%s2] sm:$0x1]
    %v23 = vlaneseq
    %v24 = vshrl.u32 %v23, 7
    %v25 = vsub.s32 0, %v24
    %v26 = vrot.slane %v21, %v25
    %vm28 = vcmask 261120
    %v30 = vsel %vm28, %v15, 0
    %v33 = vsel %vm28, %v16, 0
    %35 = vmatprep.subr.mxu0 0.0
    %36 = vmatpush1.msra.mxu0 0.0
    %37 = vmatprep.subr.mxu0 0.0
    %38 = vmatpush1.msra.mxu0 0.0
    %39 = vmatprep.subr.mxu0 0.0
    %40 = vmatpush1.msra.mxu0 0.0
    %41 = vmatprep.subr.mxu0 0.0
    %42 = vmatpush1.msra.mxu0 0.0
    %43 = vmatprep.subr.mxu0 0.0
    %44 = vmatpush1.msra.mxu0 0.0
    %45 = vmatprep.subr.mxu0 0.0
    %46 = vmatpush1.msra.mxu0 0.0
    %47 = vmatprep.subr.mxu0 0.0
    %48 = vmatpush1.msra.mxu0 0.0
    %49 = vmatprep.subr.mxu0 0.0
    %50 = vmatpush1.msra.mxu0 0.0
    %51 = vmatprep.subr.mxu0 0.0
    %52 = vmatpush1.msra.mxu0 0.0
    %53 = vmatprep.subr.mxu0 0.0
    %54 = vmatpush1.msra.mxu0 0.0
    %55 = vmatprep.subr.mxu0 0.0
    %56 = vmatpush1.msra.mxu0 0.0
    %57 = vmatprep.subr.mxu0 0.0
    %58 = vmatpush1.msra.mxu0 0.0
    %59 = vmatprep.subr.mxu0 0.0
    %60 = vmatpush1.msra.mxu0 %v20
    %61 = vmatprep.subr.mxu0 0.0
    %62 = vmatpush1.msra.mxu0 %v19
    %63 = vmatprep.subr.mxu0 0.0
    %64 = vmatpush1.msra.mxu0 %v18
    %65 = vmatprep.subr.mxu0 0.0
    %66 = vmatpush1.msra.mxu0 %v17
    %67 = vmatprep.subr.mxu0 0.0
    %68 = vmatpush2.msra.mxu0 0.0
    %69 = vmatprep.subr.mxu0 0.0
    %70 = vmatpush2.msra.mxu0 0.0
    %71 = vmatprep.subr.mxu0 0.0
    %72 = vmatpush2.msra.mxu0 0.0
    %73 = vmatprep.subr.mxu0 0.0
    %74 = vmatpush2.msra.mxu0 0.0
    %75 = vmatprep.subr.mxu0 0.0
    %76 = vmatpush2.msra.mxu0 0.0
    %77 = vmatprep.subr.mxu0 0.0
    %78 = vmatpush2.msra.mxu0 0.0
    %79 = vmatprep.subr.mxu0 0.0
    %80 = vmatpush2.msra.mxu0 0.0
    %81 = vmatprep.subr.mxu0 0.0
    %82 = vmatpush2.msra.mxu0 0.0
    %83 = vmatprep.subr.mxu0 0.0
    %84 = vmatpush2.msra.mxu0 0.0
    %85 = vmatprep.subr.mxu0 0.0
    %86 = vmatpush2.msra.mxu0 0.0
    %87 = vmatprep.subr.mxu0 0.0
    %88 = vmatpush2.msra.mxu0 0.0
    %89 = vmatprep.subr.mxu0 0.0
    %90 = vmatpush2.msra.mxu0 0.0
    %91 = vmatprep.subr.mxu0 0.0
    %92 = vmatpush2.msra.mxu0 0.0
    %93 = vmatprep.subr.mxu0 0.0
    %94 = vmatpush2.msra.mxu0 0.0
    %95 = vmatprep.subr.mxu0 0.0
    %96 = vmatpush2.msra.mxu0 0.0
    %97 = vmatprep.subr.mxu0 0.0
    %98 = vmatpush2.msra.mxu0 0.0
    %99 = vmatprep.mubr.f32.mxu0 0.0
    %100 = vmatmul.mubr.f32.gmra.mxu0 %v30
    %v101 = vpop.f32.mrf.mxu0
    %v102 = vadd.f32 %v26, %v101
    %v103 = vpop.f32.mrf.mxu0
    %104 = vmatprep.mubr.f32.mxu0 0.0
    %105 = vmatmul.mubr.f32.gmra.mxu0 %v33
    %v106 = vpop.f32.mrf.mxu0
    %v107 = vadd.f32 %v26, %v106
    %v108 = vpop.f32.mrf.mxu0
    %109 = vdwg.mxu0
    %110 = vst [vmem:[#allocation2] sm:$0xff] %v102
    %111 = vst [vmem:[#allocation2 + $0x8] sm:$0xff] %v107
    // Predicated region
    $region14: #{_lambda_.1} parent=1 // pred_check
      _
    $region15: #{_lambda_.1} parent=1 // pred_check_branch
      %113 = sbr.rel (0) target = $region17
    $region16: #{_lambda_.1} parent=1 // pred_region
      %s115 = ssub.s32 256, 256
      %116 = vsyncadd [#allocation3], %s115
      %s117 = sshll.u32 [#allocation2], 4
      %s118 = int_to_ptr.vmem [resolvable:$true] %s117
      %123 = dma.vmem_to_hbm [thread:$0]  %s118, 256, %s3, [#allocation3], 128, 128, 8
    $region17: #{_lambda_.1} parent=1 // pred_fallthru
      _
    // Predicated region
    $region18: #{_lambda_.1} parent=1 // pred_check
      _
    $region19: #{_lambda_.1} parent=1 // pred_check_branch
      %125 = sbr.rel (0) target = $region21
    $region20: #{_lambda_.1} parent=1 // pred_region
      %126 = dma.done [#allocation3], 256
    $region21: #{_lambda_.1} parent=1 // pred_fallthru
      _
    %127 = vsyncpa [#allocation3], 1

</llo_original>
